<compile_context>
chip_gen: v7x
topology: tpu7x:2x2x1
jax: 0.10.0
libtpu: 0.0.40
codegen_flags: <defaults>
</compile_context>

<pallas_src>
import functools

import jax
import jax.numpy as jnp
from jax.experimental import pallas as pl
from jax.experimental.pallas import tpu as pltpu

LANE_WIDTH = 512       # lane-dense last dim (multiple of 128) -> long DMA bursts
ROW_TILE_MAX = 2048    # up to (2048, 512) f32 = 4 MiB per block per input
NUM_CORES = 2          # leading "parallel" grid axis -> 2 TCs on v7x
_SUBLANES = 8


def _round_up(x, m):
    return ((x + m - 1) // m) * m


def _content_loss_kernel(x_ref, t_ref, loss_ref, acc_ref, *, inv_n):
    i = pl.program_id(1)

    @pl.when(i == 0)
    def _():
        acc_ref[...] = jnp.zeros_like(acc_ref)

    d = x_ref[...].astype(jnp.float32) - t_ref[...].astype(jnp.float32)
    # Lane-parallel partial sums; only a sublane reduce per step (no cross-lane
    # XLU work on the per-step critical path).
    acc_ref[...] += jnp.sum(d * d, axis=0, keepdims=True)

    @pl.when(i == pl.num_programs(1) - 1)
    def _():
        partial = jnp.sum(acc_ref[...]) * inv_n        # single cross-lane reduce
        loss_ref[...] = jnp.full(loss_ref.shape, partial, jnp.float32)


def content_loss_forward(x_nchw, target_nchw):
    """Returns (output, loss): output is the input (pass-through), and
    loss == mean((x - target)**2), matching F.mse_loss defaults."""
    assert x_nchw.shape == target_nchw.shape
    total = 1
    for s in x_nchw.shape:
        total *= s
    inv_n = 1.0 / float(total)

    # Flatten row-major, pad with zeros so padded elements contribute 0 to the
    # squared-difference sum, reshape to a lane-dense 2-D slab.
    rows_needed = pl.cdiv(total, LANE_WIDTH)
    rows_per_core = pl.cdiv(rows_needed, NUM_CORES)
    row_tile = min(ROW_TILE_MAX, _round_up(rows_per_core, _SUBLANES))
    steps = pl.cdiv(rows_per_core, row_tile)
    rows_padded = NUM_CORES * steps * row_tile
    padded_total = rows_padded * LANE_WIDTH

    def to_slab(a):
        flat = a.reshape(-1)
        flat = jnp.pad(flat, (0, padded_total - total))
        return flat.reshape(rows_padded, LANE_WIDTH)

    x2d = to_slab(x_nchw)
    t2d = to_slab(target_nchw)

    kernel = functools.partial(_content_loss_kernel, inv_n=inv_n)
    in_map = lambda c, i: (c * steps + i, 0)

    partials = pl.pallas_call(
        kernel,
        out_shape=jax.ShapeDtypeStruct((NUM_CORES * _SUBLANES, 128), jnp.float32),
        grid_spec=pltpu.PrefetchScalarGridSpec(
            num_scalar_prefetch=0,
            grid=(NUM_CORES, steps),
            in_specs=[
                pl.BlockSpec((row_tile, LANE_WIDTH), in_map),
                pl.BlockSpec((row_tile, LANE_WIDTH), in_map),
            ],
            out_specs=pl.BlockSpec((_SUBLANES, 128), lambda c, i: (c, 0)),
            scratch_shapes=[pltpu.VMEM((1, LANE_WIDTH), jnp.float32)],
        ),
        compiler_params=pltpu.CompilerParams(
            dimension_semantics=("parallel", "arbitrary"),
            vmem_limit_bytes=48 * 1024 * 1024,
        ),
    )(x2d, t2d)

    # One scalar partial per core, broadcast across its (8,128) tile.
    loss = jnp.sum(partials[::_SUBLANES, 0])

    # Pass-through: ContentLoss.forward returns its input unchanged.
    return x_nchw, loss


if __name__ == "__main__":
    key = jax.random.PRNGKey(0)
    kx, kt = jax.random.split(key)

    # Small NCHW shapes consistent with a conv feature map: (N=2, C=4, H=16, W=16).
    x = jax.random.normal(kx, (2, 4, 16, 16), dtype=jnp.float32)
    # "target" is a detached feature map captured earlier (deterministic here).
    target = jax.random.normal(kt, (2, 4, 16, 16), dtype=jnp.float32)

    out, loss = content_loss_forward(x, target)
    out = jax.block_until_ready(out)
    loss = jax.block_until_ready(loss)

    # Sanity check against plain-JAX reference (mse_loss default = mean).
    ref_loss = jnp.mean((x - target) ** 2)
    assert out.shape == x.shape and jnp.allclose(out, x), "pass-through mismatch"
    assert jnp.allclose(loss, ref_loss, rtol=1e-6, atol=1e-6), "loss mismatch"

    print("KERNEL_OK")
</pallas_src>

<mosaic_0001>
module attributes {stable_mosaic.version = 11 : i64} {
  func.func @_content_loss_kernel(%arg0: i32, %arg1: i32, %arg2: memref<8x512xf32, #tpu.memory_space<vmem>>, %arg3: memref<8x512xf32, #tpu.memory_space<vmem>>, %arg4: memref<8x128xf32, #tpu.memory_space<vmem>>, %arg5: memref<1x512xf32, #tpu.memory_space<vmem>>) attributes {dimension_semantics = [#tpu.dimension_semantics<parallel>, #tpu.dimension_semantics<arbitrary>], iteration_bounds = array<i64: 2, 1>, scalar_prefetch = 0 : i64, scratch_operands = 1 : i64, tpu.core_type = #tpu.core_type<tc>, window_params = [{transform_indices = @transform_0, window_bounds = array<i64: 8, 512>}, {transform_indices = @transform_1, window_bounds = array<i64: 8, 512>}, {transform_indices = @transform_2, window_bounds = array<i64: 8, 128>}]} {
    %c0_i32 = arith.constant 0 : i32
    %0 = arith.cmpi eq, %arg1, %c0_i32 : i32
    %1 = arith.extui %0 : i1 to i32
    %c0_i32_0 = arith.constant 0 : i32
    %2 = arith.cmpi ne, %1, %c0_i32_0 : i32
    scf.if %2 {
      %cst_10 = arith.constant 0.000000e+00 : f32
      %15 = vector.broadcast %cst_10 : f32 to vector<1x512xf32>
      %c0_11 = arith.constant 0 : index
      %c0_12 = arith.constant 0 : index
      %16 = vector.load %arg5[%c0_11, %c0_12] : memref<1x512xf32, #tpu.memory_space<vmem>>, vector<1x512xf32>
      tpu.vector_store %arg5[%c0_11, %c0_12], %15 {strides = array<i32>} : memref<1x512xf32, #tpu.memory_space<vmem>>, vector<1x512xf32>,
    } else {
    }
    %c0 = arith.constant 0 : index
    %c0_1 = arith.constant 0 : index
    %3 = vector.load %arg2[%c0, %c0_1] : memref<8x512xf32, #tpu.memory_space<vmem>>, vector<8x512xf32>
    %c0_2 = arith.constant 0 : index
    %c0_3 = arith.constant 0 : index
    %4 = vector.load %arg3[%c0_2, %c0_3] : memref<8x512xf32, #tpu.memory_space<vmem>>, vector<8x512xf32>
    %5 = arith.subf %3, %4 : vector<8x512xf32>
    %c0_4 = arith.constant 0 : index
    %c0_5 = arith.constant 0 : index
    %6 = vector.load %arg5[%c0_4, %c0_5] : memref<1x512xf32, #tpu.memory_space<vmem>>, vector<1x512xf32>
    %7 = arith.mulf %5, %5 : vector<8x512xf32>
    %cst = arith.constant dense<0.000000e+00> : vector<512xf32>
    %8 = vector.multi_reduction <add>, %7, %cst [0] : vector<8x512xf32> to vector<512xf32>
    %9 = vector.shape_cast %8 : vector<512xf32> to vector<1x512xf32>
    %10 = arith.addf %6, %9 : vector<1x512xf32>
    %c0_6 = arith.constant 0 : index
    %c0_7 = arith.constant 0 : index
    %11 = vector.load %arg5[%c0_6, %c0_7] : memref<1x512xf32, #tpu.memory_space<vmem>>, vector<1x512xf32>
    tpu.vector_store %arg5[%c0_6, %c0_7], %10 {strides = array<i32>} : memref<1x512xf32, #tpu.memory_space<vmem>>, vector<1x512xf32>,
    %c0_i32_8 = arith.constant 0 : i32
    %12 = arith.cmpi eq, %arg1, %c0_i32_8 : i32
    %13 = arith.extui %12 : i1 to i32
    %c0_i32_9 = arith.constant 0 : i32
    %14 = arith.cmpi ne, %13, %c0_i32_9 : i32
    scf.if %14 {
      %c0_10 = arith.constant 0 : index
      %c0_11 = arith.constant 0 : index
      %15 = vector.load %arg5[%c0_10, %c0_11] : memref<1x512xf32, #tpu.memory_space<vmem>>, vector<1x512xf32>
      %16 = vector.shape_cast %15 : vector<1x512xf32> to vector<1x1x512xf32>
      %cst_12 = arith.constant dense<0.000000e+00> : vector<1xf32>
      %17 = vector.multi_reduction <add>, %16, %cst_12 [1, 2] : vector<1x1x512xf32> to vector<1xf32>
      %18 = vector.shape_cast %17 : vector<1xf32> to vector<1x1x1xf32>
      %19 = vector.extract %18[0, 0, 0] : f32 from vector<1x1x1xf32>
      %cst_13 = arith.constant 4.8828125E-4 : f32
      %20 = arith.mulf %19, %cst_13 : f32
      %21 = vector.broadcast %20 : f32 to vector<8x128xf32>
      %c0_14 = arith.constant 0 : index
      %c0_15 = arith.constant 0 : index
      %22 = vector.load %arg4[%c0_14, %c0_15] : memref<8x128xf32, #tpu.memory_space<vmem>>, vector<8x128xf32>
      tpu.vector_store %arg4[%c0_14, %c0_15], %21 {strides = array<i32>} : memref<8x128xf32, #tpu.memory_space<vmem>>, vector<8x128xf32>,
    } else {
    }
    return
  }
  func.func @transform_0(%arg0: i32, %arg1: i32) -> (i32, i32) {
    %c1_i32 = arith.constant 1 : i32
    %0 = arith.muli %arg0, %c1_i32 : i32
    %1 = arith.addi %0, %arg1 : i32
    %c0_i32 = arith.constant 0 : i32
    %c0_i32_0 = arith.constant 0 : i32
    return %1, %c0_i32 : i32, i32
  }
  func.func @transform_1(%arg0: i32, %arg1: i32) -> (i32, i32) {
    %c1_i32 = arith.constant 1 : i32
    %0 = arith.muli %arg0, %c1_i32 : i32
    %1 = arith.addi %0, %arg1 : i32
    %c0_i32 = arith.constant 0 : i32
    %c0_i32_0 = arith.constant 0 : i32
    return %1, %c0_i32 : i32, i32
  }
  func.func @transform_2(%arg0: i32, %arg1: i32) -> (i32, i32) {
    %c0_i32 = arith.constant 0 : i32
    %c0_i32_0 = arith.constant 0 : i32
    return %arg0, %c0_i32 : i32, i32
  }
}

</mosaic_0001>

<llo_original>
// kernel: tpu_custom_call.1
$region0: #{tpu_custom_call.1}
  #allocation0 [shape = 'u32[]', space=smem, size = 0x4, offset = 0x4, fixed_abs, tag = 'smem constant byte address 0x4 - core index']
  #allocation1 [shape = 'u32[144,128]{1,0:T(1,128)}', space=vmem, size = 0x12000, scoped, tag = 'internal scratch']
  #allocation2 [shape = 'f32[1,512]{1,0:T(1,128)}', space=vmem, size = 0x800, scoped, tag = 'scratch operand']
  %s0 = inlined_call_operand.hbm [shape: f32[16,512], index: 0, kind: input, shape index: {}]
  %s1 = inlined_call_operand.hbm [shape: f32[16,512], index: 1, kind: input, shape index: {}]
  %s2 = inlined_call_operand.hbm [shape: f32[16,128], index: 2, kind: output, shape index: {}]
  %s3 = sld [smem:[#allocation0]]
  $region57: #{tpu_custom_call.1} parent=0
    _
  %s5 = ssub.s32 1, %s3
  %s6 = scalar_select 0, %s5, %s3
  $region1: #{tpu_custom_call.1} parent=0
    #allocation3 [shape = 'u8[32768]{0}', space=vmem, size = 0x8000, scoped, tag = 'input window, operand 0']
    #allocation4 [shape = 's32[2]{0}', space=sflag, size = 0x8, scoped, tag = 'scoped memory for tpu_custom_call.1']
    #allocation5 [shape = 's32[2]{0}', space=sflag, size = 0x8, scoped, tag = 'scoped memory for tpu_custom_call.1']
    #allocation6 [shape = 'u8[32768]{0}', space=vmem, size = 0x8000, scoped, tag = 'input window, operand 1']
    #allocation7 [shape = 's32[2]{0}', space=sflag, size = 0x8, scoped, tag = 'scoped memory for tpu_custom_call.1']
    #allocation8 [shape = 'u8[8192]{0}', space=vmem, size = 0x2000, scoped, tag = 'output window, operand 0']
    %7 = vsyncpa [#allocation4], 0
    %s8 = scalar_lea.sflag [#allocation4], 1
    %9 = vsyncpa %s8, 0
    %10 = vsyncpa [#allocation7], 0
    %s11 = scalar_lea.sflag [#allocation7], 1
    %12 = vsyncpa %s11, 0
    %13 = vsyncpa [#allocation5], 0
    %s14 = scalar_lea.sflag [#allocation5], 1
    %15 = vsyncpa %s14, 0
    loop: start=0, step=1, limit=4
    $region2: #{tpu_custom_call.1} parent=1 // loop_pre_header
      _
    $region3: #{tpu_custom_call.1} parent=1 // loop_header
      %s17 = sphi 0, %s21
      %p18 = scmp.ge.s32.totalorder %s17, 4
      %s24 = sphi 0, %s36
      %s25 = sphi 0, %s32
      %s26 = sphi 0, %s24
      %s27 = sphi 0, %s25
      %s28 = sphi 0, %s26
      %s29 = sphi 0, %s27
      %s41 = sphi 0, %s43
      %s44 = sphi 0, %s41
      %s45 = sphi 0, %s44
      %s61 = sphi 0, %s45
      %s69 = sphi 0, %s71
      %s72 = sphi 0, %s69
      %s73 = sphi 0, %s72
      %s89 = sphi 0, %s73
      %s95 = sphi 0, %s97
      %s98 = sphi 0, %s95
      %s99 = sphi 0, %s98
      %s115 = sphi 0, %s99
    $region4: #{tpu_custom_call.1} parent=1 // loop_header_branch
      %20 = sbr.rel (%p18) target = $region8
    $region5: #{tpu_custom_call.1} parent=1 // loop_body
      %s22 = ssub.s32 %s17, 1
      %s23 = ssub.s32 %s17, 2
      %s30 = sadd.s32 1, %s25
      %p31 = scmp.ge.s32.totalorder %s30, 1
      %s32 = scalar_select %p31, 0, %s30
      %s33 = sadd.s32 1, %s24
      %s34 = scalar_select %p31, %s33, %s24
      %p35 = scmp.ge.s32.totalorder %s34, 2
      %s36 = scalar_select %p35, 0, %s34
      %s37 = sadd.s32 %s24, %s25
      %s38 = sadd.s32 %s36, %s32
      %s39 = ssub.s32 %s37, %s38
      %p40 = scmp.eq.s32.totalorder %s39, 0
      %s42 = sadd.s32 %s41, 1
      %s43 = scalar_select %p40, %s41, %s42
      %p46 = pneg %p40
      %p47 = scmp.eq.s32.totalorder %s17, 1
      %p48 = por %p46, %p47
      %p49 = scmp.ne.s32.totalorder %s41, %s44
      %p50 = scmp.eq.s32.totalorder %s17, 0
      %p51 = por %p49, %p50
      %p52 = scmp.ne.s32.totalorder %s41, %s44
      %p53 = scmp.eq.s32.totalorder %s22, 1
      %p54 = por %p52, %p53
      %p55 = scmp.ne.s32.totalorder %s44, %s45
      %p56 = scmp.eq.s32.totalorder %s22, 0
      %p57 = por %p55, %p56
      %p58 = scmp.ne.s32.totalorder %s44, %s45
      %p59 = scmp.eq.s32.totalorder %s23, 1
      %p60 = por %p58, %p59
      %p62 = scmp.ne.s32.totalorder %s45, %s61
      %p63 = scmp.eq.s32.totalorder %s23, 0
      %p64 = por %p62, %p63
      %s65 = sadd.s32 %s24, %s25
      %s66 = sadd.s32 %s36, %s32
      %s67 = ssub.s32 %s65, %s66
      %p68 = scmp.eq.s32.totalorder %s67, 0
      %s70 = sadd.s32 %s69, 1
      %s71 = scalar_select %p68, %s69, %s70
      %p74 = pneg %p68
      %p75 = scmp.eq.s32.totalorder %s17, 1
      %p76 = por %p74, %p75
      %p77 = scmp.ne.s32.totalorder %s69, %s72
      %p78 = scmp.eq.s32.totalorder %s17, 0
      %p79 = por %p77, %p78
      %p80 = scmp.ne.s32.totalorder %s69, %s72
      %p81 = scmp.eq.s32.totalorder %s22, 1
      %p82 = por %p80, %p81
      %p83 = scmp.ne.s32.totalorder %s72, %s73
      %p84 = scmp.eq.s32.totalorder %s22, 0
      %p85 = por %p83, %p84
      %p86 = scmp.ne.s32.totalorder %s72, %s73
      %p87 = scmp.eq.s32.totalorder %s23, 1
      %p88 = por %p86, %p87
      %p90 = scmp.ne.s32.totalorder %s73, %s89
      %p91 = scmp.eq.s32.totalorder %s23, 0
      %p92 = por %p90, %p91
      %s93 = ssub.s32 %s24, %s36
      %p94 = scmp.eq.s32.totalorder %s93, 0
      %s96 = sadd.s32 %s95, 1
      %s97 = scalar_select %p94, %s95, %s96
      %p100 = pneg %p94
      %p101 = scmp.eq.s32.totalorder %s17, 1
      %p102 = por %p100, %p101
      %p103 = scmp.ne.s32.totalorder %s95, %s98
      %p104 = scmp.eq.s32.totalorder %s17, 0
      %p105 = por %p103, %p104
      %p106 = scmp.ne.s32.totalorder %s95, %s98
      %p107 = scmp.eq.s32.totalorder %s22, 1
      %p108 = por %p106, %p107
      %p109 = scmp.ne.s32.totalorder %s98, %s99
      %p110 = scmp.eq.s32.totalorder %s22, 0
      %p111 = por %p109, %p110
      %p112 = scmp.ne.s32.totalorder %s98, %s99
      %p113 = scmp.eq.s32.totalorder %s23, 1
      %p114 = por %p112, %p113
      %p116 = scmp.ne.s32.totalorder %s99, %s115
      %p117 = scmp.eq.s32.totalorder %s23, 0
      %p118 = por %p116, %p117
      %p119 = scmp.le.s32.totalorder 1, %s17
      %p120 = scmp.lt.s32.totalorder %s17, 3
      %p121 = pnand %p119, %p120
      %p122 = pneg %p121
      // Predicated region
      $region9: #{tpu_custom_call.1} parent=5 // pred_check
        _
      $region10: #{tpu_custom_call.1} parent=5 // pred_check_branch
        %124 = sbr.rel (%p121) target = $region12
      $region11: #{tpu_custom_call.1} parent=5 // pred_region
        %s125 = ssub.s32 %s17, 1
      $region12: #{tpu_custom_call.1} parent=5 // pred_fallthru
        _
      %p126 = scmp.lt.s32.totalorder %s17, 2
      // Predicated region
      $region13: #{tpu_custom_call.1} parent=5 // pred_check
        %p127 = pneg %p126
      $region14: #{tpu_custom_call.1} parent=5 // pred_check_branch
        %129 = sbr.rel (%p127) target = $region16
      $region15: #{tpu_custom_call.1} parent=5 // pred_region
        // Predicated region
        $region17: #{tpu_custom_call.1} parent=15 // pred_check
          %p130 = pneg %p51
        $region18: #{tpu_custom_call.1} parent=15 // pred_check_branch
          %132 = sbr.rel (%p130) target = $region20
        $region19: #{tpu_custom_call.1} parent=15 // pred_region
          %s133 = sand.u32 %s41, 1
          %s134 = scalar_lea.sflag [#allocation4], %s133
          %s135 = sand.u32 %s41, 1
          %s136 = smul.addr %s135, 32
          %s137 = scalar_lea.vmem [#allocation3], %s136
          %s138 = sadd.s32 %s24, %s25
          %s140 = ssub.s32 512, 512
          %141 = vsyncadd %s134, %s140
          %s142 = smul.addr %s138, 4
          %s143 = smul.addr %s142, 128
          %s144 = scalar_lea.hbm %s0, %s143
          %s146 = sshll.u32 %s137, 4
          %s147 = int_to_ptr.vmem [resolvable:$true] %s146
          %149 = dma.hbm_to_vmem [thread:$0]  %s144, 512, %s147, %s134
        $region20: #{tpu_custom_call.1} parent=15 // pred_fallthru
          _
        // Predicated region
        $region21: #{tpu_custom_call.1} parent=15 // pred_check
          %p150 = pneg %p79
        $region22: #{tpu_custom_call.1} parent=15 // pred_check_branch
          %152 = sbr.rel (%p150) target = $region24
        $region23: #{tpu_custom_call.1} parent=15 // pred_region
          %s153 = sand.u32 %s69, 1
          %s154 = scalar_lea.sflag [#allocation7], %s153
          %s155 = sand.u32 %s69, 1
          %s156 = smul.addr %s155, 32
          %s157 = scalar_lea.vmem [#allocation6], %s156
          %s158 = sadd.s32 %s24, %s25
          %s160 = ssub.s32 512, 512
          %161 = vsyncadd %s154, %s160
          %s162 = smul.addr %s158, 4
          %s163 = smul.addr %s162, 128
          %s164 = scalar_lea.hbm %s1, %s163
          %s166 = sshll.u32 %s157, 4
          %s167 = int_to_ptr.vmem [resolvable:$true] %s166
          %169 = dma.hbm_to_vmem [thread:$0]  %s164, 512, %s167, %s154
        $region24: #{tpu_custom_call.1} parent=15 // pred_fallthru
          _
      $region16: #{tpu_custom_call.1} parent=5 // pred_fallthru
        _
      %p170 = scmp.le.s32.totalorder 1, %s17
      %p171 = scmp.lt.s32.totalorder %s17, 3
      %p172 = pnand %p170, %p171
      %p173 = pneg %p172
      // Predicated region
      $region25: #{tpu_custom_call.1} parent=5 // pred_check
        _
      $region26: #{tpu_custom_call.1} parent=5 // pred_check_branch
        %175 = sbr.rel (%p172) target = $region28
      $region27: #{tpu_custom_call.1} parent=5 // pred_region
        %s176 = ssub.s32 %s17, 1
        %s177 = sand.u32 %s44, 1
        %s178 = scalar_lea.sflag [#allocation4], %s177
        %s179 = sand.u32 %s44, 1
        %s180 = smul.addr %s179, 32
        %s181 = scalar_lea.vmem [#allocation3], %s180
        // Predicated region
        $region29: #{tpu_custom_call.1} parent=27 // pred_check
          %p182 = pneg %p57
        $region30: #{tpu_custom_call.1} parent=27 // pred_check_branch
          %184 = sbr.rel (%p182) target = $region32
        $region31: #{tpu_custom_call.1} parent=27 // pred_region
          %185 = dma.done %s178, 512
        $region32: #{tpu_custom_call.1} parent=27 // pred_fallthru
          _
        %s186 = sand.u32 %s72, 1
        %s187 = scalar_lea.sflag [#allocation7], %s186
        %s188 = sand.u32 %s72, 1
        %s189 = smul.addr %s188, 32
        %s190 = scalar_lea.vmem [#allocation6], %s189
        // Predicated region
        $region33: #{tpu_custom_call.1} parent=27 // pred_check
          %p191 = pneg %p85
        $region34: #{tpu_custom_call.1} parent=27 // pred_check_branch
          %193 = sbr.rel (%p191) target = $region36
        $region35: #{tpu_custom_call.1} parent=27 // pred_region
          %194 = dma.done %s187, 512
        $region36: #{tpu_custom_call.1} parent=27 // pred_fallthru
          _
        %s195 = sand.u32 %s44, 1
        %s196 = scalar_lea.sflag [#allocation4], %s195
        %s197 = sand.u32 %s44, 1
        %s198 = smul.addr %s197, 32
        %s199 = scalar_lea.vmem [#allocation3], %s198
        %p200 = pneg %p57
        %p201 = pneg %p54
        %s202 = sand.u32 %s72, 1
        %s203 = scalar_lea.sflag [#allocation7], %s202
        %s204 = sand.u32 %s72, 1
        %s205 = smul.addr %s204, 32
        %s206 = scalar_lea.vmem [#allocation6], %s205
        %p207 = pneg %p85
        %p208 = pneg %p82
        %p209 = pneg %p111
        %p210 = pneg %p108
        %s211 = sand.u32 %s98, 1
        %s212 = scalar_lea.sflag [#allocation5], %s211
        %s213 = sand.u32 %s98, 1
        %s214 = smul.addr %s213, 8
        %s215 = scalar_lea.vmem [#allocation8], %s214
        %s216 = sadd.s32 %s26, %s27
        %s217 = sadd.s32 %s26, %s27
        %p218 = scmp.eq.s32.totalorder %s27, 0
        // Predicated region
        $region37: #{tpu_custom_call.1} parent=27 // pred_check
          %p219 = pneg %p218
        $region38: #{tpu_custom_call.1} parent=27 // pred_check_branch
          %221 = sbr.rel (%p219) target = $region40
        $region39: #{tpu_custom_call.1} parent=27 // pred_region
          %v222 = vlaneseq
          %vm223 = vcmp.ge.s32.totalorder %v222, 0
          %vm224 = vcmp.lt.s32.totalorder %v222, 512
          %vm225 = vmand %vm223, %vm224
          %226 = vst.msk [vmem:[#allocation2] sm:$0xf] %vm225, 0.0
        $region40: #{tpu_custom_call.1} parent=27 // pred_fallthru
          _
        %v227 = vld [vmem:[%s181] sm:$0xff]
        %v228 = vld [vmem:[%s181 + $0x8] sm:$0xff]
        %v229 = vld [vmem:[%s181 + $0x10] sm:$0xff]
        %v230 = vld [vmem:[%s181 + $0x18] sm:$0xff]
        %v231 = vld [vmem:[%s190] sm:$0xff]
        %v232 = vld [vmem:[%s190 + $0x8] sm:$0xff]
        %v233 = vld [vmem:[%s190 + $0x10] sm:$0xff]
        %v234 = vld [vmem:[%s190 + $0x18] sm:$0xff]
        %v235 = vsub.f32 %v227, %v231
        %v236 = vsub.f32 %v228, %v232
        %v237 = vsub.f32 %v229, %v233
        %v238 = vsub.f32 %v230, %v234
        %v239 = vld [vmem:[#allocation2] sm:$0xf]
        %v240 = vmul.f32 %v235, %v235
        %v241 = vmul.f32 %v236, %v236
        %v242 = vmul.f32 %v237, %v237
        %v243 = vmul.f32 %v238, %v238
        %v244 = vrot.slane %v240, 4
        %v245 = vadd.f32 %v240, %v244
        %v246 = vrot.slane %v245, 2
        %v247 = vadd.f32 %v245, %v246
        %v248 = vrot.slane %v247, 1
        %v249 = vadd.f32 %v247, %v248
        %v250 = vrot.slane %v241, 4
        %v251 = vadd.f32 %v241, %v250
        %v252 = vrot.slane %v251, 2
        %v253 = vadd.f32 %v251, %v252
        %v254 = vrot.slane %v253, 1
        %v255 = vadd.f32 %v253, %v254
        %v256 = vrot.slane %v242, 4
        %v257 = vadd.f32 %v242, %v256
        %v258 = vrot.slane %v257, 2
        %v259 = vadd.f32 %v257, %v258
        %v260 = vrot.slane %v259, 1
        %v261 = vadd.f32 %v259, %v260
        %v262 = vrot.slane %v243, 4
        %v263 = vadd.f32 %v243, %v262
        %v264 = vrot.slane %v263, 2
        %v265 = vadd.f32 %v263, %v264
        %v266 = vrot.slane %v265, 1
        %v267 = vadd.f32 %v265, %v266
        %v272 = vcombine.low %v249, %v255
        %v273 = vcombine.low %v261, %v267
        %v275 = vunpack.c.l.s4 1966171168
        %v276 = vunpack.c.0.s8 %v275
        %v277 = vlaneseq
        %v278 = vshrl.u32 %v277, 7
        %v279 = vsub.s32 %v276, %v278
        %v280 = vrot.slane %v272, %v279
        %v282 = vunpack.c.l.s4 1966171168
        %v283 = vunpack.c.0.s8 %v282
        %v284 = vlaneseq
        %v285 = vshrl.u32 %v284, 7
        %v286 = vsub.s32 %v283, %v285
        %v287 = vrot.slane %v273, %v286
        %v288 = vcombine.low %v280, %v287
        %v290 = vunpack.c.l.s4 1966171168
        %v291 = vunpack.c.0.s8 %v290
        %v292 = vlaneseq
        %v293 = vshrl.u32 %v292, 7
        %v294 = vsub.s32 %v291, %v293
        %v295 = vrot.slane %v288, %v294
        %v297 = vadd.f32 %v239, %v295
        %v298 = vlaneseq
        %vm299 = vcmp.ge.s32.totalorder %v298, 0
        %vm300 = vcmp.lt.s32.totalorder %v298, 512
        %vm301 = vmand %vm299, %vm300
        %302 = vst.msk [vmem:[#allocation2] sm:$0xf] %vm301, %v297
        // Predicated region
        $region41: #{tpu_custom_call.1} parent=27 // pred_check
          %p303 = pneg %p218
        $region42: #{tpu_custom_call.1} parent=27 // pred_check_branch
          %305 = sbr.rel (%p303) target = $region44
        $region43: #{tpu_custom_call.1} parent=27 // pred_region
          %v306 = vld [vmem:[#allocation2] sm:$0xf]
          %v308 = vlaneseq
          %v309 = vshrl.u32 %v308, 7
          %v310 = vsub.s32 0, %v309
          %v311 = vrot.slane %v306, %v310
          %v312 = vlaneseq
          %v313 = vshrl.u32 %v312, 7
          %v314 = vsub.s32 1, %v313
          %v315 = vrot.slane %v306, %v314
          %v316 = vlaneseq
          %v317 = vshrl.u32 %v316, 7
          %v318 = vsub.s32 2, %v317
          %v319 = vrot.slane %v306, %v318
          %v320 = vlaneseq
          %v321 = vshrl.u32 %v320, 7
          %v322 = vsub.s32 3, %v321
          %v323 = vrot.slane %v306, %v322
          %vm328 = vcmask 1040384
          %v329 = vsel %vm328, %v311, 0.0
          %v330 = vsel %vm328, %v315, 0.0
          %v331 = vadd.f32 %v329, %v330
          %v332 = vsel %vm328, %v319, 0.0
          %v333 = vadd.f32 %v331, %v332
          %v334 = vsel %vm328, %v323, 0.0
          %v335 = vadd.f32 %v333, %v334
          %336 = vadd.xlane.f32.xlu0 %v335
          %v337 = vpop.xlane.xlu0 %336
          %v338 = vrot.slane %v337, 4
          %v339 = vadd.f32 %v337, %v338
          %v340 = vrot.slane %v339, 2
          %v341 = vadd.f32 %v339, %v340
          %v342 = vrot.slane %v341, 1
          %v343 = vadd.f32 %v341, %v342
          %s344 = vtos %v343
          %s345 = smul.f32 %s344, 0.00048828125
          %v346 = vstv %s345
          %347 = vst [vmem:[%s215] sm:$0xff] %v346
        $region44: #{tpu_custom_call.1} parent=27 // pred_fallthru
          _
        %s348 = sand.u32 %s98, 1
        %s349 = scalar_lea.sflag [#allocation5], %s348
        %s350 = sand.u32 %s98, 1
        %s351 = smul.addr %s350, 8
        %s352 = scalar_lea.vmem [#allocation8], %s351
        // Predicated region
        $region45: #{tpu_custom_call.1} parent=27 // pred_check
          %p353 = pneg %p108
        $region46: #{tpu_custom_call.1} parent=27 // pred_check_branch
          %355 = sbr.rel (%p353) target = $region48
        $region47: #{tpu_custom_call.1} parent=27 // pred_region
          %s357 = ssub.s32 128, 128
          %358 = vsyncadd %s349, %s357
          %s359 = smul.addr %s26, 128
          %s360 = scalar_lea.hbm %s2, %s359
          %s362 = sshll.u32 %s352, 4
          %s363 = int_to_ptr.vmem [resolvable:$true] %s362
          %365 = dma.vmem_to_hbm [thread:$0]  %s363, 128, %s360, %s349
        $region48: #{tpu_custom_call.1} parent=27 // pred_fallthru
          _
      $region28: #{tpu_custom_call.1} parent=5 // pred_fallthru
        _
      %p366 = scmp.le.s32.totalorder 2, %s17
      // Predicated region
      $region49: #{tpu_custom_call.1} parent=5 // pred_check
        %p367 = pneg %p366
      $region50: #{tpu_custom_call.1} parent=5 // pred_check_branch
        %369 = sbr.rel (%p367) target = $region52
      $region51: #{tpu_custom_call.1} parent=5 // pred_region
        %s370 = ssub.s32 %s17, 2
        // Predicated region
        $region53: #{tpu_custom_call.1} parent=51 // pred_check
          %p371 = pneg %p114
        $region54: #{tpu_custom_call.1} parent=51 // pred_check_branch
          %373 = sbr.rel (%p371) target = $region56
        $region55: #{tpu_custom_call.1} parent=51 // pred_region
          %s374 = sand.u32 %s99, 1
          %s375 = scalar_lea.sflag [#allocation5], %s374
          %s376 = sand.u32 %s99, 1
          %s377 = smul.addr %s376, 8
          %s378 = scalar_lea.vmem [#allocation8], %s377
          %379 = dma.done %s375, 128
        $region56: #{tpu_custom_call.1} parent=51 // pred_fallthru
          _
      $region52: #{tpu_custom_call.1} parent=5 // pred_fallthru
        _
    $region6: #{tpu_custom_call.1} parent=1 // loop_footer
      %s21 = sadd.s32 1, %s17
    $region7: #{tpu_custom_call.1} parent=1 // loop_footer_branch
      %16 = sbr.rel target = $region3
    $region8: #{tpu_custom_call.1} parent=1 // loop_exit
      _
    %380 = vsyncpa [#allocation4], 1
    %s381 = scalar_lea.sflag [#allocation4], 1
    %382 = vsyncpa %s381, 1
    %383 = vsyncpa [#allocation7], 1
    %s384 = scalar_lea.sflag [#allocation7], 1
    %385 = vsyncpa %s384, 1
    %386 = vsyncpa [#allocation5], 1
    %s387 = scalar_lea.sflag [#allocation5], 1
    %388 = vsyncpa %s387, 1

</llo_original>
